<compile_context>
chip_gen: v6e
topology: v6e:2x2x1
jax: 0.10.0
libtpu: 0.0.40
codegen_flags: <defaults>
</compile_context>

<pallas_src>
import functools

import jax
import jax.numpy as jnp
from jax.experimental import pallas as pl
from jax.experimental.pallas import tpu as pltpu

FEATURE_DIM = 512
OUT_DIM = 24
LANE = 128           # lane width used for VMEM padding accounting
_DEFAULT_TM = 4096   # batch-tile rows (f32: 8 MiB/input buffer, double-buffered)


def _linear_kernel(x_ref, w_ref, b_ref, o_ref):
    # x_ref: (TM, 512) f32|bf16, w_ref: (512, 24) f32|bf16,
    # b_ref: (1, 24) f32, o_ref: (TM, 24) f32.
    acc = jnp.dot(x_ref[...], w_ref[...], preferred_element_type=jnp.float32)
    o_ref[...] = (acc + b_ref[...].astype(jnp.float32)).astype(o_ref.dtype)


def prepare_params(weight, bias, dtype=jnp.float32):
    """One-time conversion of PyTorch-layout params.

    (24, 512) / (24,)  ->  (512, 24) in `dtype` (f32 or bf16), (1, 24) f32 bias.
    """
    return weight.T.astype(dtype), bias.reshape(1, OUT_DIM).astype(jnp.float32)


def _tpu_kind():
    try:
        return jax.devices()[0].device_kind.lower()
    except Exception:
        return "unknown"


def _generation_caps():
    kind = _tpu_kind()
    is_v7x = "7" in kind
    if is_v7x:
        # v7x: 64 MiB physical VMEM per TC -> leave headroom; 2 TCs/chip.
        return {"tm_cap": 4096, "vmem_cap": 48 << 20, "is_v7x": True}
    # v5e / v6e: 128 MiB physical VMEM (scoped default 16/32 MiB -> overridden).
    return {"tm_cap": 8192, "vmem_cap": 96 << 20, "is_v7x": False}


def _vmem_budget_bytes(tm, x_itemsize):
    """Double-buffered footprint with lane-padded (…,128) tiles, + headroom."""
    x_buf = tm * FEATURE_DIM * x_itemsize        # streamed input tile
    o_buf = tm * LANE * 4                        # output tile padded 24 -> 128 lanes
    w_buf = FEATURE_DIM * LANE * x_itemsize      # resident weight (lane-padded)
    b_buf = 8 * LANE * 4                         # resident bias (sublane/lane padded)
    return 2 * (x_buf + o_buf + w_buf + b_buf) + (8 << 20)


@functools.partial(jax.jit, static_argnames=("tm",))
def regressor_forward(x, w_t, b2d, *, tm=_DEFAULT_TM):
    """x: (B, 512) f32|bf16; w_t: (512, 24) f32|bf16; b2d: (1, 24) f32 -> (B, 24) f32."""
    B = x.shape[0]
    caps = _generation_caps()

    # Clamp the batch tile: generation cap, multiple of 8, never larger than needed.
    tm = ((min(tm, caps["tm_cap"]) + 7) // 8) * 8
    tm = max(8, min(tm, ((B + 7) // 8) * 8))
    grid = (pl.cdiv(B, tm),)

    x_itemsize = jnp.dtype(x.dtype).itemsize
    w_itemsize = jnp.dtype(w_t.dtype).itemsize
    vmem_limit = int(min(caps["vmem_cap"],
                         max(32 << 20, _vmem_budget_bytes(tm, x_itemsize))))

    if caps["is_v7x"]:
        core_parallel = getattr(pltpu, "CORE_PARALLEL", None)
        dim_sem = (core_parallel,) if core_parallel is not None else ("parallel",)
    else:
        dim_sem = ("parallel",)

    cost = pl.CostEstimate(
        flops=2 * B * FEATURE_DIM * OUT_DIM,
        transcendentals=0,
        bytes_accessed=(B * FEATURE_DIM * x_itemsize
                        + FEATURE_DIM * OUT_DIM * w_itemsize
                        + B * OUT_DIM * 4),
    )

    return pl.pallas_call(
        _linear_kernel,
        out_shape=jax.ShapeDtypeStruct((B, OUT_DIM), jnp.float32),
        grid_spec=pltpu.PrefetchScalarGridSpec(
            num_scalar_prefetch=0,
            grid=grid,
            in_specs=[
                # x: streamed, batch-tiled -> pipelined double buffering.
                pl.BlockSpec((tm, FEATURE_DIM), lambda i: (i, 0)),
                # weight / bias: resident across all grid steps.
                pl.BlockSpec((FEATURE_DIM, OUT_DIM), lambda i: (0, 0)),
                pl.BlockSpec((1, OUT_DIM), lambda i: (0, 0)),
            ],
            # Keep the HBM output 24-wide (no lane padding in HBM; masked
            # stores are free slack in this mem-bound kernel).
            out_specs=pl.BlockSpec((tm, OUT_DIM), lambda i: (i, 0)),
        ),
        compiler_params=pltpu.CompilerParams(
            dimension_semantics=dim_sem,
            vmem_limit_bytes=vmem_limit),
        cost_estimate=cost,
    )(x, w_t, b2d)


if __name__ == "__main__":
    key = jax.random.PRNGKey(0)
    kx, kw, kb, kx2, kx3 = jax.random.split(key, 5)

    # Deterministic synthetic parameters (PyTorch nn.Linear layout).
    bound = 1.0 / (FEATURE_DIM ** 0.5)
    weight = jax.random.uniform(kw, (OUT_DIM, FEATURE_DIM),
                                minval=-bound, maxval=bound, dtype=jnp.float32)
    bias = jax.random.uniform(kb, (OUT_DIM,),
                              minval=-bound, maxval=bound, dtype=jnp.float32)

    # ---- f32 path (exact module semantics), single grid step ----
    w_t, b2d = prepare_params(weight, bias)
    B = 8
    x = jax.random.normal(kx, (B, FEATURE_DIM), dtype=jnp.float32)
    out = jax.block_until_ready(regressor_forward(x, w_t, b2d))
    ref = x @ weight.T + bias
    assert out.shape == (B, OUT_DIM)
    assert jnp.allclose(out, ref, atol=1e-4, rtol=1e-4)

    # ---- ragged batch: multi-tile pipeline + padded last tile ----
    B2 = 300  # not a multiple of the tile -> grid=3 with a padded last tile
    x2 = jax.random.normal(kx2, (B2, FEATURE_DIM), dtype=jnp.float32)
    out2 = jax.block_until_ready(regressor_forward(x2, w_t, b2d, tm=128))
    ref2 = x2 @ weight.T + bias
    assert out2.shape == (B2, OUT_DIM)
    assert jnp.allclose(out2, ref2, atol=1e-4, rtol=1e-4)

    # ---- bf16 streaming path (opt-in: halves HBM traffic of x), f32 accumulate ----
    w_t_bf, b2d_bf = prepare_params(weight, bias, dtype=jnp.bfloat16)
    B3 = 64
    x3 = jax.random.normal(kx3, (B3, FEATURE_DIM),
                           dtype=jnp.float32).astype(jnp.bfloat16)
    out3 = jax.block_until_ready(regressor_forward(x3, w_t_bf, b2d_bf))
    ref3 = x3.astype(jnp.float32) @ w_t_bf.astype(jnp.float32) + bias
    assert out3.shape == (B3, OUT_DIM)
    assert jnp.allclose(out3, ref3, atol=2e-2, rtol=2e-2)

    print("KERNEL_OK")
</pallas_src>

<mosaic_0001>
module attributes {stable_mosaic.version = 11 : i64} {
  func.func @_linear_kernel(%arg0: i32, %arg1: memref<8x512xf32, #tpu.memory_space<vmem>>, %arg2: memref<512x24xf32, #tpu.memory_space<vmem>>, %arg3: memref<1x24xf32, #tpu.memory_space<vmem>>, %arg4: memref<8x24xf32, #tpu.memory_space<vmem>>) attributes {dimension_semantics = [#tpu.dimension_semantics<parallel>], iteration_bounds = array<i64: 1>, scalar_prefetch = 0 : i64, scratch_operands = 0 : i64, tpu.core_type = #tpu.core_type<tc>, window_params = [{transform_indices = @transform_0, window_bounds = array<i64: 8, 512>}, {pipeline_mode = #tpu.pipeline_mode<synchronous>, transform_indices = @transform_1, window_bounds = array<i64: 512, 24>}, {pipeline_mode = #tpu.pipeline_mode<synchronous>, transform_indices = @transform_2, window_bounds = array<i64: 1, 24>}, {transform_indices = @transform_3, window_bounds = array<i64: 8, 24>}]} {
    %c0 = arith.constant 0 : index
    %c0_0 = arith.constant 0 : index
    %0 = vector.load %arg1[%c0, %c0_0] : memref<8x512xf32, #tpu.memory_space<vmem>>, vector<8x512xf32>
    %c0_1 = arith.constant 0 : index
    %c0_2 = arith.constant 0 : index
    %1 = vector.load %arg2[%c0_1, %c0_2] : memref<512x24xf32, #tpu.memory_space<vmem>>, vector<512x24xf32>
    %cst = arith.constant dense<0.000000e+00> : vector<8x24xf32>
    %2 = tpu.matmul %0, %1, %cst {dimension_numbers = #tpu.dot_dimension_numbers<[1], [0], [0], [1], [0, 0, 1, 1], [], []>} : vector<8x512xf32>, vector<512x24xf32>, vector<8x24xf32> -> vector<8x24xf32>
    %c0_3 = arith.constant 0 : index
    %c0_4 = arith.constant 0 : index
    %3 = vector.load %arg3[%c0_3, %c0_4] : memref<1x24xf32, #tpu.memory_space<vmem>>, vector<1x24xf32>
    %4 = vector.broadcast %3 : vector<1x24xf32> to vector<8x24xf32>
    %5 = arith.addf %2, %4 : vector<8x24xf32>
    %c0_5 = arith.constant 0 : index
    %c0_6 = arith.constant 0 : index
    %6 = vector.load %arg4[%c0_5, %c0_6] : memref<8x24xf32, #tpu.memory_space<vmem>>, vector<8x24xf32>
    tpu.vector_store %arg4[%c0_5, %c0_6], %5 {strides = array<i32>} : memref<8x24xf32, #tpu.memory_space<vmem>>, vector<8x24xf32>,
    return
  }
  func.func @transform_0(%arg0: i32) -> (i32, i32) {
    %c0_i32 = arith.constant 0 : i32
    %c0_i32_0 = arith.constant 0 : i32
    return %arg0, %c0_i32 : i32, i32
  }
  func.func @transform_1(%arg0: i32) -> (i32, i32) {
    %c0_i32 = arith.constant 0 : i32
    %c0_i32_0 = arith.constant 0 : i32
    %c0_i32_1 = arith.constant 0 : i32
    return %c0_i32, %c0_i32_0 : i32, i32
  }
  func.func @transform_2(%arg0: i32) -> (i32, i32) {
    %c0_i32 = arith.constant 0 : i32
    %c0_i32_0 = arith.constant 0 : i32
    %c0_i32_1 = arith.constant 0 : i32
    return %c0_i32, %c0_i32_0 : i32, i32
  }
  func.func @transform_3(%arg0: i32) -> (i32, i32) {
    %c0_i32 = arith.constant 0 : i32
    %c0_i32_0 = arith.constant 0 : i32
    return %arg0, %c0_i32 : i32, i32
  }
}

</mosaic_0001>

<llo_original>
// kernel: regressor_forward.1
$region0: #{regressor_forward.1}
  #allocation0 [shape = 'u32[]', space=smem, size = 0x4, offset = 0x4, fixed_abs, tag = 'smem constant byte address 0x4 - core index']
  #allocation1 [shape = 'u32[144,128]{1,0:T(1,128)}', space=vmem, size = 0x12000, scoped, tag = 'internal scratch']
  %s0 = inlined_call_operand.vmem [shape: f32[8,512], index: 0, kind: input, shape index: {}]
  %s1 = inlined_call_operand.vmem [shape: f32[512,24], index: 1, kind: input, shape index: {}]
  %s2 = inlined_call_operand.vmem [shape: f32[1,24], index: 2, kind: input, shape index: {}]
  %s3 = inlined_call_operand.hbm [shape: f32[8,24], index: 3, kind: output, shape index: {}]
  %s4 = sld [smem:[#allocation0]]
  $region22: #{regressor_forward.1} parent=0
    _
  %s6 = ssub.s32 1, %s4
  %s7 = scalar_select 0, %s6, %s4
  $region1: #{regressor_forward.1} parent=0
    #allocation2 [shape = 'u8[4096]{0}', space=vmem, size = 0x1000, scoped, tag = 'output window, operand 0, single buffered']
    #allocation3 [shape = 's32[1]{0}', space=sflag, size = 0x4, scoped, tag = 'scoped memory for regressor_forward.1']
    %8 = vsyncpa [#allocation3], 0
    // Predicated region
    $region2: #{regressor_forward.1} parent=1 // pred_check
      _
    $region3: #{regressor_forward.1} parent=1 // pred_check_branch
      %10 = sbr.rel (0) target = $region5
    $region4: #{regressor_forward.1} parent=1 // pred_region
      _
    $region5: #{regressor_forward.1} parent=1 // pred_fallthru
      _
    // Predicated region
    $region6: #{regressor_forward.1} parent=1 // pred_check
      _
    $region7: #{regressor_forward.1} parent=1 // pred_check_branch
      %12 = sbr.rel (0) target = $region9
    $region8: #{regressor_forward.1} parent=1 // pred_region
      _
    $region9: #{regressor_forward.1} parent=1 // pred_fallthru
      _
    // Predicated region
    $region10: #{regressor_forward.1} parent=1 // pred_check
      _
    $region11: #{regressor_forward.1} parent=1 // pred_check_branch
      %14 = sbr.rel (0) target = $region13
    $region12: #{regressor_forward.1} parent=1 // pred_region
      _
    $region13: #{regressor_forward.1} parent=1 // pred_fallthru
      _
    %v15 = vld [vmem:[%s0] sm:$0xff]
    %v16 = vld [vmem:[%s0 + $0x8] sm:$0xff]
    %v17 = vld [vmem:[%s0 + $0x10] sm:$0xff]
    %v18 = vld [vmem:[%s0 + $0x18] sm:$0xff]
    %v19 = vld [vmem:[%s1] sm:$0xff]
    %v20 = vld [vmem:[%s1 + $0x8] sm:$0xff]
    %v21 = vld [vmem:[%s1 + $0x10] sm:$0xff]
    %v22 = vld [vmem:[%s1 + $0x18] sm:$0xff]
    %v23 = vld [vmem:[%s1 + $0x20] sm:$0xff]
    %v24 = vld [vmem:[%s1 + $0x28] sm:$0xff]
    %v25 = vld [vmem:[%s1 + $0x30] sm:$0xff]
    %v26 = vld [vmem:[%s1 + $0x38] sm:$0xff]
    %v27 = vld [vmem:[%s1 + $0x40] sm:$0xff]
    %v28 = vld [vmem:[%s1 + $0x48] sm:$0xff]
    %v29 = vld [vmem:[%s1 + $0x50] sm:$0xff]
    %v30 = vld [vmem:[%s1 + $0x58] sm:$0xff]
    %v31 = vld [vmem:[%s1 + $0x60] sm:$0xff]
    %v32 = vld [vmem:[%s1 + $0x68] sm:$0xff]
    %v33 = vld [vmem:[%s1 + $0x70] sm:$0xff]
    %v34 = vld [vmem:[%s1 + $0x78] sm:$0xff]
    %v35 = vld [vmem:[%s1 + $0x80] sm:$0xff]
    %v36 = vld [vmem:[%s1 + $0x88] sm:$0xff]
    %v37 = vld [vmem:[%s1 + $0x90] sm:$0xff]
    %v38 = vld [vmem:[%s1 + $0x98] sm:$0xff]
    %v39 = vld [vmem:[%s1 + $0xa0] sm:$0xff]
    %v40 = vld [vmem:[%s1 + $0xa8] sm:$0xff]
    %v41 = vld [vmem:[%s1 + $0xb0] sm:$0xff]
    %v42 = vld [vmem:[%s1 + $0xb8] sm:$0xff]
    %v43 = vld [vmem:[%s1 + $0xc0] sm:$0xff]
    %v44 = vld [vmem:[%s1 + $0xc8] sm:$0xff]
    %v45 = vld [vmem:[%s1 + $0xd0] sm:$0xff]
    %v46 = vld [vmem:[%s1 + $0xd8] sm:$0xff]
    %v47 = vld [vmem:[%s1 + $0xe0] sm:$0xff]
    %v48 = vld [vmem:[%s1 + $0xe8] sm:$0xff]
    %v49 = vld [vmem:[%s1 + $0xf0] sm:$0xff]
    %v50 = vld [vmem:[%s1 + $0xf8] sm:$0xff]
    %v51 = vld [vmem:[%s1 + $0x100] sm:$0xff]
    %v52 = vld [vmem:[%s1 + $0x108] sm:$0xff]
    %v53 = vld [vmem:[%s1 + $0x110] sm:$0xff]
    %v54 = vld [vmem:[%s1 + $0x118] sm:$0xff]
    %v55 = vld [vmem:[%s1 + $0x120] sm:$0xff]
    %v56 = vld [vmem:[%s1 + $0x128] sm:$0xff]
    %v57 = vld [vmem:[%s1 + $0x130] sm:$0xff]
    %v58 = vld [vmem:[%s1 + $0x138] sm:$0xff]
    %v59 = vld [vmem:[%s1 + $0x140] sm:$0xff]
    %v60 = vld [vmem:[%s1 + $0x148] sm:$0xff]
    %v61 = vld [vmem:[%s1 + $0x150] sm:$0xff]
    %v62 = vld [vmem:[%s1 + $0x158] sm:$0xff]
    %v63 = vld [vmem:[%s1 + $0x160] sm:$0xff]
    %v64 = vld [vmem:[%s1 + $0x168] sm:$0xff]
    %v65 = vld [vmem:[%s1 + $0x170] sm:$0xff]
    %v66 = vld [vmem:[%s1 + $0x178] sm:$0xff]
    %v67 = vld [vmem:[%s1 + $0x180] sm:$0xff]
    %v68 = vld [vmem:[%s1 + $0x188] sm:$0xff]
    %v69 = vld [vmem:[%s1 + $0x190] sm:$0xff]
    %v70 = vld [vmem:[%s1 + $0x198] sm:$0xff]
    %v71 = vld [vmem:[%s1 + $0x1a0] sm:$0xff]
    %v72 = vld [vmem:[%s1 + $0x1a8] sm:$0xff]
    %v73 = vld [vmem:[%s1 + $0x1b0] sm:$0xff]
    %v74 = vld [vmem:[%s1 + $0x1b8] sm:$0xff]
    %v75 = vld [vmem:[%s1 + $0x1c0] sm:$0xff]
    %v76 = vld [vmem:[%s1 + $0x1c8] sm:$0xff]
    %v77 = vld [vmem:[%s1 + $0x1d0] sm:$0xff]
    %v78 = vld [vmem:[%s1 + $0x1d8] sm:$0xff]
    %v79 = vld [vmem:[%s1 + $0x1e0] sm:$0xff]
    %v80 = vld [vmem:[%s1 + $0x1e8] sm:$0xff]
    %v81 = vld [vmem:[%s1 + $0x1f0] sm:$0xff]
    %v82 = vld [vmem:[%s1 + $0x1f8] sm:$0xff]
    %v83 = vld [vmem:[%s2] sm:$0x1]
    %v85 = vlaneseq
    %v86 = vshrl.u32 %v85, 7
    %v87 = vsub.s32 0, %v86
    %v88 = vrot.slane %v83, %v87
    %90 = vmatprep.subr.mxu0 0.0
    %91 = vmatpush1.msra.mxu0 %v34
    %92 = vmatprep.subr.mxu0 0.0
    %93 = vmatpush1.msra.mxu0 %v33
    %94 = vmatprep.subr.mxu0 0.0
    %95 = vmatpush1.msra.mxu0 %v32
    %96 = vmatprep.subr.mxu0 0.0
    %97 = vmatpush1.msra.mxu0 %v31
    %98 = vmatprep.subr.mxu0 0.0
    %99 = vmatpush1.msra.mxu0 %v30
    %100 = vmatprep.subr.mxu0 0.0
    %101 = vmatpush1.msra.mxu0 %v29
    %102 = vmatprep.subr.mxu0 0.0
    %103 = vmatpush1.msra.mxu0 %v28
    %104 = vmatprep.subr.mxu0 0.0
    %105 = vmatpush1.msra.mxu0 %v27
    %106 = vmatprep.subr.mxu0 0.0
    %107 = vmatpush1.msra.mxu0 %v26
    %108 = vmatprep.subr.mxu0 0.0
    %109 = vmatpush1.msra.mxu0 %v25
    %110 = vmatprep.subr.mxu0 0.0
    %111 = vmatpush1.msra.mxu0 %v24
    %112 = vmatprep.subr.mxu0 0.0
    %113 = vmatpush1.msra.mxu0 %v23
    %114 = vmatprep.subr.mxu0 0.0
    %115 = vmatpush1.msra.mxu0 %v22
    %116 = vmatprep.subr.mxu0 0.0
    %117 = vmatpush1.msra.mxu0 %v21
    %118 = vmatprep.subr.mxu0 0.0
    %119 = vmatpush1.msra.mxu0 %v20
    %120 = vmatprep.subr.mxu0 0.0
    %121 = vmatpush1.msra.mxu0 %v19
    %122 = vmatprep.subr.mxu0 0.0
    %123 = vmatpush2.msra.mxu0 %v50
    %124 = vmatprep.subr.mxu0 0.0
    %125 = vmatpush2.msra.mxu0 %v49
    %126 = vmatprep.subr.mxu0 0.0
    %127 = vmatpush2.msra.mxu0 %v48
    %128 = vmatprep.subr.mxu0 0.0
    %129 = vmatpush2.msra.mxu0 %v47
    %130 = vmatprep.subr.mxu0 0.0
    %131 = vmatpush2.msra.mxu0 %v46
    %132 = vmatprep.subr.mxu0 0.0
    %133 = vmatpush2.msra.mxu0 %v45
    %134 = vmatprep.subr.mxu0 0.0
    %135 = vmatpush2.msra.mxu0 %v44
    %136 = vmatprep.subr.mxu0 0.0
    %137 = vmatpush2.msra.mxu0 %v43
    %138 = vmatprep.subr.mxu0 0.0
    %139 = vmatpush2.msra.mxu0 %v42
    %140 = vmatprep.subr.mxu0 0.0
    %141 = vmatpush2.msra.mxu0 %v41
    %142 = vmatprep.subr.mxu0 0.0
    %143 = vmatpush2.msra.mxu0 %v40
    %144 = vmatprep.subr.mxu0 0.0
    %145 = vmatpush2.msra.mxu0 %v39
    %146 = vmatprep.subr.mxu0 0.0
    %147 = vmatpush2.msra.mxu0 %v38
    %148 = vmatprep.subr.mxu0 0.0
    %149 = vmatpush2.msra.mxu0 %v37
    %150 = vmatprep.subr.mxu0 0.0
    %151 = vmatpush2.msra.mxu0 %v36
    %152 = vmatprep.subr.mxu0 0.0
    %153 = vmatpush2.msra.mxu0 %v35
    %154 = vmatprep.mubr.f32.mxu0 %v16
    %155 = vmatmul.mubr.f32.gmra.mxu0 %v15
    %v156 = vpop.f32.mrf.mxu0
    %v157 = vadd.f32 %v88, %v156
    %v158 = vpop.f32.mrf.mxu0
    %159 = vdwg.mxu0
    %160 = vmatprep.subr.mxu0 0.0
    %161 = vmatpush1.msra.mxu0 %v66
    %162 = vmatprep.subr.mxu0 0.0
    %163 = vmatpush1.msra.mxu0 %v65
    %164 = vmatprep.subr.mxu0 0.0
    %165 = vmatpush1.msra.mxu0 %v64
    %166 = vmatprep.subr.mxu0 0.0
    %167 = vmatpush1.msra.mxu0 %v63
    %168 = vmatprep.subr.mxu0 0.0
    %169 = vmatpush1.msra.mxu0 %v62
    %170 = vmatprep.subr.mxu0 0.0
    %171 = vmatpush1.msra.mxu0 %v61
    %172 = vmatprep.subr.mxu0 0.0
    %173 = vmatpush1.msra.mxu0 %v60
    %174 = vmatprep.subr.mxu0 0.0
    %175 = vmatpush1.msra.mxu0 %v59
    %176 = vmatprep.subr.mxu0 0.0
    %177 = vmatpush1.msra.mxu0 %v58
    %178 = vmatprep.subr.mxu0 0.0
    %179 = vmatpush1.msra.mxu0 %v57
    %180 = vmatprep.subr.mxu0 0.0
    %181 = vmatpush1.msra.mxu0 %v56
    %182 = vmatprep.subr.mxu0 0.0
    %183 = vmatpush1.msra.mxu0 %v55
    %184 = vmatprep.subr.mxu0 0.0
    %185 = vmatpush1.msra.mxu0 %v54
    %186 = vmatprep.subr.mxu0 0.0
    %187 = vmatpush1.msra.mxu0 %v53
    %188 = vmatprep.subr.mxu0 0.0
    %189 = vmatpush1.msra.mxu0 %v52
    %190 = vmatprep.subr.mxu0 0.0
    %191 = vmatpush1.msra.mxu0 %v51
    %192 = vmatprep.subr.mxu0 0.0
    %193 = vmatpush2.msra.mxu0 %v82
    %194 = vmatprep.subr.mxu0 0.0
    %195 = vmatpush2.msra.mxu0 %v81
    %196 = vmatprep.subr.mxu0 0.0
    %197 = vmatpush2.msra.mxu0 %v80
    %198 = vmatprep.subr.mxu0 0.0
    %199 = vmatpush2.msra.mxu0 %v79
    %200 = vmatprep.subr.mxu0 0.0
    %201 = vmatpush2.msra.mxu0 %v78
    %202 = vmatprep.subr.mxu0 0.0
    %203 = vmatpush2.msra.mxu0 %v77
    %204 = vmatprep.subr.mxu0 0.0
    %205 = vmatpush2.msra.mxu0 %v76
    %206 = vmatprep.subr.mxu0 0.0
    %207 = vmatpush2.msra.mxu0 %v75
    %208 = vmatprep.subr.mxu0 0.0
    %209 = vmatpush2.msra.mxu0 %v74
    %210 = vmatprep.subr.mxu0 0.0
    %211 = vmatpush2.msra.mxu0 %v73
    %212 = vmatprep.subr.mxu0 0.0
    %213 = vmatpush2.msra.mxu0 %v72
    %214 = vmatprep.subr.mxu0 0.0
    %215 = vmatpush2.msra.mxu0 %v71
    %216 = vmatprep.subr.mxu0 0.0
    %217 = vmatpush2.msra.mxu0 %v70
    %218 = vmatprep.subr.mxu0 0.0
    %219 = vmatpush2.msra.mxu0 %v69
    %220 = vmatprep.subr.mxu0 0.0
    %221 = vmatpush2.msra.mxu0 %v68
    %222 = vmatprep.subr.mxu0 0.0
    %223 = vmatpush2.msra.mxu0 %v67
    %224 = vmatprep.mubr.f32.mxu0 %v18
    %225 = vmatmul.mubr.f32.gmra.mxu0 %v17
    %v226 = vpop.f32.mrf.mxu0
    %v227 = vadd.f32 %v157, %v226
    %v228 = vpop.f32.mrf.mxu0
    %229 = vdwg.mxu0
    %vm230 = vcmask 195584
    %231 = vst.msk [vmem:[#allocation2] sm:$0xff] %vm230, %v227
    // Predicated region
    $region14: #{regressor_forward.1} parent=1 // pred_check
      _
    $region15: #{regressor_forward.1} parent=1 // pred_check_branch
      %233 = sbr.rel (0) target = $region17
    $region16: #{regressor_forward.1} parent=1 // pred_region
      %s235 = ssub.s32 128, 128
      %236 = vsyncadd [#allocation3], %s235
      %s238 = sshll.u32 [#allocation2], 4
      %s239 = int_to_ptr.vmem [resolvable:$true] %s238
      %241 = dma.vmem_to_hbm [thread:$0]  %s239, 128, %s3, [#allocation3]
    $region17: #{regressor_forward.1} parent=1 // pred_fallthru
      _
    // Predicated region
    $region18: #{regressor_forward.1} parent=1 // pred_check
      _
    $region19: #{regressor_forward.1} parent=1 // pred_check_branch
      %243 = sbr.rel (0) target = $region21
    $region20: #{regressor_forward.1} parent=1 // pred_region
      %244 = dma.done [#allocation3], 128
    $region21: #{regressor_forward.1} parent=1 // pred_fallthru
      _
    %245 = vsyncpa [#allocation3], 1

</llo_original>
